<compile_context>
chip_gen: v7x
topology: tpu7x:2x2x1
jax: 0.10.0
libtpu: 0.0.40
codegen_flags: <defaults>
</compile_context>

<pallas_src>
import jax
import jax.numpy as jnp
from jax.experimental import pallas as pl
from jax.experimental.pallas import tpu as pltpu


def _cdiv(a, b):
    return -(-a // b)


def _vmem_capacity_bytes():
    """Per-core VMEM capacity; conservative 64 MiB fallback (v7x-safe)."""
    try:
        cap = int(pltpu.get_tpu_info().vmem_capacity_bytes)
        if cap >= (16 << 20):
            return cap
    except Exception:
        pass
    return 64 << 20


def _make_layer_lm_kernel(vocab: int, tv: int, num_vocab_tiles: int, mask_vocab: bool):
    """Kernel body for fixed (vocab, TV); ragged-vocab masking compiled in only
    when actually needed."""

    def kernel(x_ref, w_ref, b_ref, out_ref, max_sc, idx_sc):
        j = pl.program_id(1)  # vocab-tile index (reduction axis, innermost)

        @pl.when(j == 0)
        def _init():
            max_sc[...] = jnp.full_like(max_sc, -jnp.inf)
            idx_sc[...] = jnp.zeros_like(idx_sc)

        # (TM, TV) logits tile: bf16 x bf16 -> f32 accumulate on the MXU.
        logits = jnp.dot(x_ref[...], w_ref[...],
                         preferred_element_type=jnp.float32)
        # Bias is resident for the whole grid; pick this tile's row.
        if num_vocab_tiles == 1:
            logits = logits + b_ref[...]
        else:
            logits = logits + b_ref[pl.ds(j, 1), :]

        iota = jax.lax.broadcasted_iota(jnp.int32, logits.shape, 1)
        if mask_vocab:
            # Ragged last vocab tile: kill out-of-range columns.
            # NOTE: must stay AFTER the bias add so OOB garbage is overwritten.
            col = iota + j * tv
            logits = jnp.where(col < vocab, logits, -jnp.inf)

        # Per-row max and first-occurrence argmax within this vocab tile.
        tile_max = jnp.max(logits, axis=-1, keepdims=True)
        tile_arg = jnp.min(jnp.where(logits == tile_max, iota, tv),
                           axis=-1, keepdims=True) + j * tv

        # Merge with running accumulator; strict '>' keeps earliest index on ties.
        better = tile_max > max_sc[...]
        idx_sc[...] = jnp.where(better, tile_arg, idx_sc[...])
        max_sc[...] = jnp.where(better, tile_max, max_sc[...])

        @pl.when(j == pl.num_programs(1) - 1)
        def _finalize():
            out_ref[...] = idx_sc[...]

    return kernel


def layer_lm_forward(x, w_t, b, *, tm=None, tv=None):
    """argmax over vocab of (x @ w_t + b).

    x:   (..., seq, hidden) float
    w_t: (hidden, vocab)    float  (transposed torch Linear weight)
    b:   (vocab,)           float
    returns (..., seq) int32 token ids.
    """
    hidden = x.shape[-1]
    vocab = w_t.shape[1]
    assert w_t.shape == (hidden, vocab)
    assert b.shape == (vocab,)
    lead_shape = x.shape[:-1]

    # bf16 operands for the MXU / halved weight HBM traffic; f32 accumulate.
    x2 = x.reshape(-1, hidden).astype(jnp.bfloat16)
    w2 = w_t.astype(jnp.bfloat16)
    m = x2.shape[0]

    capacity = _vmem_capacity_bytes()
    budget = (capacity * 45) // 100  # tile working-set budget (v7x-safe fraction)

    # ---------------- row (M) tile --------------------------------------------
    # Weight HBM traffic = ceil(M/TM) * H * V * 2B, so: never split M more than
    # VMEM forces. Cap ~768 on 128 MiB parts (>= v6e crossover), ~512 on 64 MiB.
    if tm is None:
        tm_cap_chip = 768 if capacity >= (100 << 20) else 512
        x_rows_cap = max(8, ((budget // 4) // (2 * hidden)) // 8 * 8)
        tm_cap = max(8, min(tm_cap_chip, x_rows_cap))
        if m <= tm_cap:
            tm = m  # single full-extent row block (legal for any m)
        else:
            n_row_blocks = _cdiv(m, tm_cap)
            tm = min(tm_cap, _cdiv(_cdiv(m, n_row_blocks), 8) * 8)  # balanced

    # ---------------- vocab (V) tile -------------------------------------------
    if tv is None:
        x_bytes = tm * hidden * 2                 # x tile (bf16, single-buffered)
        fixed = 2 * tm * 128 * 4                  # lane-padded (tm,1) scratch accs
        fixed += 2 * tm * 128 * 4                 # lane-padded (tm,1) i32 out blocks
        fixed += 2 * vocab * 4 + (1 << 20)        # resident bias (generous)
        per_col = 2 * hidden * 2 + 3 * tm * 4     # W (bf16, 2 bufs) + f32 logits/temps
        avail = budget - x_bytes - fixed
        tv_fit = max(256, min(4096, (avail // per_col) // 256 * 256))
        if vocab <= tv_fit:
            tv = vocab                            # whole vocab in one tile, no mask
        else:
            tv = 0
            for cand in range(tv_fit, 255, -256):  # prefer a mask-free divisor
                if vocab % cand == 0:
                    tv = cand
                    break
            if tv == 0:
                tv = tv_fit                       # fall back to in-kernel masking
    tv = min(tv, vocab)

    mask_vocab = (vocab % tv) != 0
    nvt = _cdiv(vocab, tv)
    vocab_padded = nvt * tv

    # Bias padded to nvt*tv and laid out (nvt, tv): one resident VMEM block for
    # the whole grid (constant index_map); sliced by sublane index j in-kernel.
    b2 = jnp.pad(b.astype(jnp.float32), (0, vocab_padded - vocab)).reshape(nvt, tv)

    grid = (_cdiv(m, tm), nvt)
    kernel = _make_layer_lm_kernel(vocab, tv, nvt, mask_vocab)

    # Scoped VMEM limit: generous estimate (x counted double-buffered to cover
    # the fallback path) but capped at 3/4 of per-core capacity (48 MiB on v7x).
    nvt_pad = _cdiv(nvt, 8) * 8
    est_vmem = (2 * tm * hidden * 2        # x tiles (bf16)
                + 2 * hidden * tv * 2      # weight tiles (bf16), double-buffered
                + 2 * nvt_pad * tv * 4     # resident bias block (f32)
                + 2 * tm * 128 * 4         # (tm,1) i32 out blocks, lane-padded
                + 2 * tm * 128 * 4         # scratch accumulators, lane-padded
                + 3 * tm * tv * 4)         # f32 logits + elementwise temporaries
    vmem_limit = int(max(32 << 20, min(est_vmem + (8 << 20), (capacity * 3) // 4)))

    def build(single_buffer_x):
        if single_buffer_x:
            # x block is constant across the inner vocab loop -> 1 buffer is enough.
            x_spec = pl.BlockSpec((tm, hidden), lambda i, j: (i, 0),
                                  pipeline_mode=pl.Buffered(1))
        else:
            x_spec = pl.BlockSpec((tm, hidden), lambda i, j: (i, 0))
        return pl.pallas_call(
            kernel,
            out_shape=jax.ShapeDtypeStruct((m, 1), jnp.int32),
            grid_spec=pltpu.PrefetchScalarGridSpec(
                num_scalar_prefetch=0,
                grid=grid,
                in_specs=[
                    x_spec,
                    pl.BlockSpec((hidden, tv), lambda i, j: (0, j)),
                    pl.BlockSpec((nvt, tv), lambda i, j: (0, 0)),   # resident bias
                ],
                out_specs=pl.BlockSpec((tm, 1), lambda i, j: (i, 0)),
                scratch_shapes=[
                    pltpu.VMEM((tm, 1), jnp.float32),  # running row max
                    pltpu.VMEM((tm, 1), jnp.int32),    # running row argmax
                ],
            ),
            compiler_params=pltpu.CompilerParams(
                dimension_semantics=("parallel", "arbitrary"),
                vmem_limit_bytes=vmem_limit,
            ),
        )

    try:
        out = build(single_buffer_x=True)(x2, w2, b2)
    except Exception:
        # Fallback for JAX builds that reject single-buffered (Buffered(1)) specs.
        out = build(single_buffer_x=False)(x2, w2, b2)

    # Note: for tiny M on v7x both TensorCores could be kept busy by splitting
    # the *vocab* axis across cores with a partial-argmax merge epilogue; not
    # done here (advanced restructure, decode-only benefit).
    return out.reshape(lead_shape)


if __name__ == "__main__":
    # Small shapes consistent with the module's forward contract.
    batch, seq, hidden, vocab = 2, 8, 32, 256

    key = jax.random.PRNGKey(0)
    kx, kw, kb = jax.random.split(key, 3)

    x = jax.random.normal(kx, (batch, seq, hidden), dtype=jnp.float32)
    # Synthetic Linear params (torch stores (vocab, hidden); kernel uses (hidden, vocab)).
    bound = 1.0 / (hidden ** 0.5)
    w_t = jax.random.uniform(kw, (hidden, vocab), jnp.float32, -bound, bound)
    b = jax.random.uniform(kb, (vocab,), jnp.float32, -bound, bound)

    out = layer_lm_forward(x, w_t, b)
    out = jax.block_until_ready(out)

    # Reference with matching numerics (bf16 MXU operands, f32 accumulate).
    logits_ref = (jnp.dot(x.reshape(-1, hidden).astype(jnp.bfloat16),
                          w_t.astype(jnp.bfloat16),
                          preferred_element_type=jnp.float32) + b[None, :])
    ref = jnp.argmax(logits_ref, axis=-1).astype(jnp.int32).reshape(batch, seq)

    assert out.shape == (batch, seq), out.shape
    assert out.dtype == jnp.int32
    assert bool(jnp.all(out == ref))

    print("KERNEL_OK")
</pallas_src>

<mosaic_0001>
module attributes {stable_mosaic.version = 11 : i64} {
  func.func @kernel(%arg0: i32, %arg1: i32, %arg2: memref<16x32xbf16, #tpu.memory_space<vmem>>, %arg3: memref<32x256xbf16, #tpu.memory_space<vmem>>, %arg4: memref<1x256xf32, #tpu.memory_space<vmem>>, %arg5: memref<16x1xi32, #tpu.memory_space<vmem>>, %arg6: memref<16x1xf32, #tpu.memory_space<vmem>>, %arg7: memref<16x1xi32, #tpu.memory_space<vmem>>) attributes {dimension_semantics = [#tpu.dimension_semantics<parallel>, #tpu.dimension_semantics<arbitrary>], iteration_bounds = array<i64: 1, 1>, scalar_prefetch = 0 : i64, scratch_operands = 2 : i64, tpu.core_type = #tpu.core_type<tc>, window_params = [{pipeline_mode = #tpu.pipeline_mode<synchronous>, transform_indices = @transform_0, window_bounds = array<i64: 16, 32>}, {transform_indices = @transform_1, window_bounds = array<i64: 32, 256>}, {pipeline_mode = #tpu.pipeline_mode<synchronous>, transform_indices = @transform_2, window_bounds = array<i64: 1, 256>}, {transform_indices = @transform_3, window_bounds = array<i64: 16, 1>}]} {
    %c0_i32 = arith.constant 0 : i32
    %0 = arith.cmpi eq, %arg1, %c0_i32 : i32
    %1 = arith.extui %0 : i1 to i32
    %c0_i32_0 = arith.constant 0 : i32
    %2 = arith.cmpi ne, %1, %c0_i32_0 : i32
    scf.if %2 {
      %cst_21 = arith.constant 0xFF800000 : f32
      %32 = vector.broadcast %cst_21 : f32 to vector<16x1xf32>
      %c0_22 = arith.constant 0 : index
      %c0_23 = arith.constant 0 : index
      %33 = vector.load %arg6[%c0_22, %c0_23] : memref<16x1xf32, #tpu.memory_space<vmem>>, vector<16x1xf32>
      tpu.vector_store %arg6[%c0_22, %c0_23], %32 {strides = array<i32>} : memref<16x1xf32, #tpu.memory_space<vmem>>, vector<16x1xf32>,
      %c0_i32_24 = arith.constant 0 : i32
      %34 = vector.broadcast %c0_i32_24 : i32 to vector<16x1xi32>
      %c0_25 = arith.constant 0 : index
      %c0_26 = arith.constant 0 : index
      %35 = vector.load %arg7[%c0_25, %c0_26] : memref<16x1xi32, #tpu.memory_space<vmem>>, vector<16x1xi32>
      tpu.vector_store %arg7[%c0_25, %c0_26], %34 {strides = array<i32>} : memref<16x1xi32, #tpu.memory_space<vmem>>, vector<16x1xi32>,
    } else {
    }
    %c0 = arith.constant 0 : index
    %c0_1 = arith.constant 0 : index
    %3 = vector.load %arg2[%c0, %c0_1] : memref<16x32xbf16, #tpu.memory_space<vmem>>, vector<16x32xbf16>
    %c0_2 = arith.constant 0 : index
    %c0_3 = arith.constant 0 : index
    %4 = vector.load %arg3[%c0_2, %c0_3] : memref<32x256xbf16, #tpu.memory_space<vmem>>, vector<32x256xbf16>
    %cst = arith.constant dense<0.000000e+00> : vector<16x256xf32>
    %5 = tpu.matmul %3, %4, %cst {dimension_numbers = #tpu.dot_dimension_numbers<[1], [0], [0], [1], [0, 0, 1, 1], [], []>} : vector<16x32xbf16>, vector<32x256xbf16>, vector<16x256xf32> -> vector<16x256xf32>
    %c0_4 = arith.constant 0 : index
    %c0_5 = arith.constant 0 : index
    %6 = vector.load %arg4[%c0_4, %c0_5] : memref<1x256xf32, #tpu.memory_space<vmem>>, vector<1x256xf32>
    %7 = vector.broadcast %6 : vector<1x256xf32> to vector<16x256xf32>
    %8 = arith.addf %5, %7 : vector<16x256xf32>
    %9 = tpu.iota {dimensions = array<i32: 1>} : vector<16x256xi32>
    %cst_6 = arith.constant dense<0xFF800000> : vector<16xf32>
    %10 = vector.multi_reduction <maximumf>, %8, %cst_6 [1] : vector<16x256xf32> to vector<16xf32>
    %11 = vector.shape_cast %10 : vector<16xf32> to vector<16x1xf32>
    %12 = vector.broadcast %11 : vector<16x1xf32> to vector<16x256xf32>
    %13 = arith.cmpf oeq, %8, %12 : vector<16x256xf32>
    %c256_i32 = arith.constant 256 : i32
    %14 = vector.broadcast %c256_i32 : i32 to vector<16x256xi32>
    %15 = arith.select %13, %9, %14 : vector<16x256xi1>, vector<16x256xi32>
    %cst_7 = arith.constant dense<2147483647> : vector<16xi32>
    %16 = vector.multi_reduction <minsi>, %15, %cst_7 [1] : vector<16x256xi32> to vector<16xi32>
    %17 = vector.shape_cast %16 : vector<16xi32> to vector<16x1xi32>
    %c256_i32_8 = arith.constant 256 : i32
    %18 = arith.muli %arg1, %c256_i32_8 : i32
    %19 = vector.broadcast %18 : i32 to vector<16x1xi32>
    %20 = arith.addi %17, %19 : vector<16x1xi32>
    %c0_9 = arith.constant 0 : index
    %c0_10 = arith.constant 0 : index
    %21 = vector.load %arg6[%c0_9, %c0_10] : memref<16x1xf32, #tpu.memory_space<vmem>>, vector<16x1xf32>
    %22 = arith.cmpf ogt, %11, %21 : vector<16x1xf32>
    %c0_11 = arith.constant 0 : index
    %c0_12 = arith.constant 0 : index
    %23 = vector.load %arg7[%c0_11, %c0_12] : memref<16x1xi32, #tpu.memory_space<vmem>>, vector<16x1xi32>
    %24 = arith.select %22, %20, %23 : vector<16x1xi1>, vector<16x1xi32>
    %c0_13 = arith.constant 0 : index
    %c0_14 = arith.constant 0 : index
    %25 = vector.load %arg7[%c0_13, %c0_14] : memref<16x1xi32, #tpu.memory_space<vmem>>, vector<16x1xi32>
    tpu.vector_store %arg7[%c0_13, %c0_14], %24 {strides = array<i32>} : memref<16x1xi32, #tpu.memory_space<vmem>>, vector<16x1xi32>,
    %c0_15 = arith.constant 0 : index
    %c0_16 = arith.constant 0 : index
    %26 = vector.load %arg6[%c0_15, %c0_16] : memref<16x1xf32, #tpu.memory_space<vmem>>, vector<16x1xf32>
    %27 = arith.select %22, %11, %26 : vector<16x1xi1>, vector<16x1xf32>
    %c0_17 = arith.constant 0 : index
    %c0_18 = arith.constant 0 : index
    %28 = vector.load %arg6[%c0_17, %c0_18] : memref<16x1xf32, #tpu.memory_space<vmem>>, vector<16x1xf32>
    tpu.vector_store %arg6[%c0_17, %c0_18], %27 {strides = array<i32>} : memref<16x1xf32, #tpu.memory_space<vmem>>, vector<16x1xf32>,
    %c0_i32_19 = arith.constant 0 : i32
    %29 = arith.cmpi eq, %arg1, %c0_i32_19 : i32
    %30 = arith.extui %29 : i1 to i32
    %c0_i32_20 = arith.constant 0 : i32
    %31 = arith.cmpi ne, %30, %c0_i32_20 : i32
    scf.if %31 {
      %c0_21 = arith.constant 0 : index
      %c0_22 = arith.constant 0 : index
      %32 = vector.load %arg7[%c0_21, %c0_22] : memref<16x1xi32, #tpu.memory_space<vmem>>, vector<16x1xi32>
      %c0_23 = arith.constant 0 : index
      %c0_24 = arith.constant 0 : index
      %33 = vector.load %arg5[%c0_23, %c0_24] : memref<16x1xi32, #tpu.memory_space<vmem>>, vector<16x1xi32>
      tpu.vector_store %arg5[%c0_23, %c0_24], %32 {strides = array<i32>} : memref<16x1xi32, #tpu.memory_space<vmem>>, vector<16x1xi32>,
    } else {
    }
    return
  }
  func.func @transform_0(%arg0: i32, %arg1: i32) -> (i32, i32) {
    %c0_i32 = arith.constant 0 : i32
    %c0_i32_0 = arith.constant 0 : i32
    return %arg0, %c0_i32 : i32, i32
  }
  func.func @transform_1(%arg0: i32, %arg1: i32) -> (i32, i32) {
    %c0_i32 = arith.constant 0 : i32
    %c0_i32_0 = arith.constant 0 : i32
    return %c0_i32, %arg1 : i32, i32
  }
  func.func @transform_2(%arg0: i32, %arg1: i32) -> (i32, i32) {
    %c0_i32 = arith.constant 0 : i32
    %c0_i32_0 = arith.constant 0 : i32
    %c0_i32_1 = arith.constant 0 : i32
    return %c0_i32, %c0_i32_0 : i32, i32
  }
  func.func @transform_3(%arg0: i32, %arg1: i32) -> (i32, i32) {
    %c0_i32 = arith.constant 0 : i32
    %c0_i32_0 = arith.constant 0 : i32
    return %arg0, %c0_i32 : i32, i32
  }
}

module attributes {stable_mosaic.version = 11 : i64} {
  func.func @kernel(%arg0: i32, %arg1: i32, %arg2: memref<16x32xbf16, #tpu.memory_space<vmem>>, %arg3: memref<32x256xbf16, #tpu.memory_space<vmem>>, %arg4: memref<1x256xf32, #tpu.memory_space<vmem>>, %arg5: memref<16x1xi32, #tpu.memory_space<vmem>>, %arg6: memref<16x1xf32, #tpu.memory_space<vmem>>, %arg7: memref<16x1xi32, #tpu.memory_space<vmem>>) attributes {dimension_semantics = [#tpu.dimension_semantics<parallel>, #tpu.dimension_semantics<arbitrary>], iteration_bounds = array<i64: 1, 1>, scalar_prefetch = 0 : i64, scratch_operands = 2 : i64, tpu.core_type = #tpu.core_type<tc>, window_params = [{transform_indices = @transform_0, window_bounds = array<i64: 16, 32>}, {transform_indices = @transform_1, window_bounds = array<i64: 32, 256>}, {pipeline_mode = #tpu.pipeline_mode<synchronous>, transform_indices = @transform_2, window_bounds = array<i64: 1, 256>}, {transform_indices = @transform_3, window_bounds = array<i64: 16, 1>}]} {
    %c0_i32 = arith.constant 0 : i32
    %0 = arith.cmpi eq, %arg1, %c0_i32 : i32
    %1 = arith.extui %0 : i1 to i32
    %c0_i32_0 = arith.constant 0 : i32
    %2 = arith.cmpi ne, %1, %c0_i32_0 : i32
    scf.if %2 {
      %cst_21 = arith.constant 0xFF800000 : f32
      %32 = vector.broadcast %cst_21 : f32 to vector<16x1xf32>
      %c0_22 = arith.constant 0 : index
      %c0_23 = arith.constant 0 : index
      %33 = vector.load %arg6[%c0_22, %c0_23] : memref<16x1xf32, #tpu.memory_space<vmem>>, vector<16x1xf32>
      tpu.vector_store %arg6[%c0_22, %c0_23], %32 {strides = array<i32>} : memref<16x1xf32, #tpu.memory_space<vmem>>, vector<16x1xf32>,
      %c0_i32_24 = arith.constant 0 : i32
      %34 = vector.broadcast %c0_i32_24 : i32 to vector<16x1xi32>
      %c0_25 = arith.constant 0 : index
      %c0_26 = arith.constant 0 : index
      %35 = vector.load %arg7[%c0_25, %c0_26] : memref<16x1xi32, #tpu.memory_space<vmem>>, vector<16x1xi32>
      tpu.vector_store %arg7[%c0_25, %c0_26], %34 {strides = array<i32>} : memref<16x1xi32, #tpu.memory_space<vmem>>, vector<16x1xi32>,
    } else {
    }
    %c0 = arith.constant 0 : index
    %c0_1 = arith.constant 0 : index
    %3 = vector.load %arg2[%c0, %c0_1] : memref<16x32xbf16, #tpu.memory_space<vmem>>, vector<16x32xbf16>
    %c0_2 = arith.constant 0 : index
    %c0_3 = arith.constant 0 : index
    %4 = vector.load %arg3[%c0_2, %c0_3] : memref<32x256xbf16, #tpu.memory_space<vmem>>, vector<32x256xbf16>
    %cst = arith.constant dense<0.000000e+00> : vector<16x256xf32>
    %5 = tpu.matmul %3, %4, %cst {dimension_numbers = #tpu.dot_dimension_numbers<[1], [0], [0], [1], [0, 0, 1, 1], [], []>} : vector<16x32xbf16>, vector<32x256xbf16>, vector<16x256xf32> -> vector<16x256xf32>
    %c0_4 = arith.constant 0 : index
    %c0_5 = arith.constant 0 : index
    %6 = vector.load %arg4[%c0_4, %c0_5] : memref<1x256xf32, #tpu.memory_space<vmem>>, vector<1x256xf32>
    %7 = vector.broadcast %6 : vector<1x256xf32> to vector<16x256xf32>
    %8 = arith.addf %5, %7 : vector<16x256xf32>
    %9 = tpu.iota {dimensions = array<i32: 1>} : vector<16x256xi32>
    %cst_6 = arith.constant dense<0xFF800000> : vector<16xf32>
    %10 = vector.multi_reduction <maximumf>, %8, %cst_6 [1] : vector<16x256xf32> to vector<16xf32>
    %11 = vector.shape_cast %10 : vector<16xf32> to vector<16x1xf32>
    %12 = vector.broadcast %11 : vector<16x1xf32> to vector<16x256xf32>
    %13 = arith.cmpf oeq, %8, %12 : vector<16x256xf32>
    %c256_i32 = arith.constant 256 : i32
    %14 = vector.broadcast %c256_i32 : i32 to vector<16x256xi32>
    %15 = arith.select %13, %9, %14 : vector<16x256xi1>, vector<16x256xi32>
    %cst_7 = arith.constant dense<2147483647> : vector<16xi32>
    %16 = vector.multi_reduction <minsi>, %15, %cst_7 [1] : vector<16x256xi32> to vector<16xi32>
    %17 = vector.shape_cast %16 : vector<16xi32> to vector<16x1xi32>
    %c256_i32_8 = arith.constant 256 : i32
    %18 = arith.muli %arg1, %c256_i32_8 : i32
    %19 = vector.broadcast %18 : i32 to vector<16x1xi32>
    %20 = arith.addi %17, %19 : vector<16x1xi32>
    %c0_9 = arith.constant 0 : index
    %c0_10 = arith.constant 0 : index
    %21 = vector.load %arg6[%c0_9, %c0_10] : memref<16x1xf32, #tpu.memory_space<vmem>>, vector<16x1xf32>
    %22 = arith.cmpf ogt, %11, %21 : vector<16x1xf32>
    %c0_11 = arith.constant 0 : index
    %c0_12 = arith.constant 0 : index
    %23 = vector.load %arg7[%c0_11, %c0_12] : memref<16x1xi32, #tpu.memory_space<vmem>>, vector<16x1xi32>
    %24 = arith.select %22, %20, %23 : vector<16x1xi1>, vector<16x1xi32>
    %c0_13 = arith.constant 0 : index
    %c0_14 = arith.constant 0 : index
    %25 = vector.load %arg7[%c0_13, %c0_14] : memref<16x1xi32, #tpu.memory_space<vmem>>, vector<16x1xi32>
    tpu.vector_store %arg7[%c0_13, %c0_14], %24 {strides = array<i32>} : memref<16x1xi32, #tpu.memory_space<vmem>>, vector<16x1xi32>,
    %c0_15 = arith.constant 0 : index
    %c0_16 = arith.constant 0 : index
    %26 = vector.load %arg6[%c0_15, %c0_16] : memref<16x1xf32, #tpu.memory_space<vmem>>, vector<16x1xf32>
    %27 = arith.select %22, %11, %26 : vector<16x1xi1>, vector<16x1xf32>
    %c0_17 = arith.constant 0 : index
    %c0_18 = arith.constant 0 : index
    %28 = vector.load %arg6[%c0_17, %c0_18] : memref<16x1xf32, #tpu.memory_space<vmem>>, vector<16x1xf32>
    tpu.vector_store %arg6[%c0_17, %c0_18], %27 {strides = array<i32>} : memref<16x1xf32, #tpu.memory_space<vmem>>, vector<16x1xf32>,
    %c0_i32_19 = arith.constant 0 : i32
    %29 = arith.cmpi eq, %arg1, %c0_i32_19 : i32
    %30 = arith.extui %29 : i1 to i32
    %c0_i32_20 = arith.constant 0 : i32
    %31 = arith.cmpi ne, %30, %c0_i32_20 : i32
    scf.if %31 {
      %c0_21 = arith.constant 0 : index
      %c0_22 = arith.constant 0 : index
      %32 = vector.load %arg7[%c0_21, %c0_22] : memref<16x1xi32, #tpu.memory_space<vmem>>, vector<16x1xi32>
      %c0_23 = arith.constant 0 : index
      %c0_24 = arith.constant 0 : index
      %33 = vector.load %arg5[%c0_23, %c0_24] : memref<16x1xi32, #tpu.memory_space<vmem>>, vector<16x1xi32>
      tpu.vector_store %arg5[%c0_23, %c0_24], %32 {strides = array<i32>} : memref<16x1xi32, #tpu.memory_space<vmem>>, vector<16x1xi32>,
    } else {
    }
    return
  }
  func.func @transform_0(%arg0: i32, %arg1: i32) -> (i32, i32) {
    %c0_i32 = arith.constant 0 : i32
    %c0_i32_0 = arith.constant 0 : i32
    return %arg0, %c0_i32 : i32, i32
  }
  func.func @transform_1(%arg0: i32, %arg1: i32) -> (i32, i32) {
    %c0_i32 = arith.constant 0 : i32
    %c0_i32_0 = arith.constant 0 : i32
    return %c0_i32, %arg1 : i32, i32
  }
  func.func @transform_2(%arg0: i32, %arg1: i32) -> (i32, i32) {
    %c0_i32 = arith.constant 0 : i32
    %c0_i32_0 = arith.constant 0 : i32
    %c0_i32_1 = arith.constant 0 : i32
    return %c0_i32, %c0_i32_0 : i32, i32
  }
  func.func @transform_3(%arg0: i32, %arg1: i32) -> (i32, i32) {
    %c0_i32 = arith.constant 0 : i32
    %c0_i32_0 = arith.constant 0 : i32
    return %arg0, %c0_i32 : i32, i32
  }
}

</mosaic_0001>

<llo_original>
// kernel: tpu_custom_call.1
$region0: #{tpu_custom_call.1}
  #allocation0 [shape = 'u32[]', space=smem, size = 0x4, offset = 0x4, fixed_abs, tag = 'smem constant byte address 0x4 - core index']
  #allocation1 [shape = 'u32[144,128]{1,0:T(1,128)}', space=vmem, size = 0x12000, scoped, tag = 'internal scratch']
  #allocation2 [shape = 'f32[16,1]{1,0:T(8,128)}', space=vmem, size = 0x2000, scoped, tag = 'scratch operand']
  #allocation3 [shape = 's32[16,1]{1,0:T(8,128)}', space=vmem, size = 0x2000, scoped, tag = 'scratch operand']
  %s0 = inlined_call_operand.hbm [shape: bf16[16,32], index: 0, kind: input, shape index: {}]
  %s1 = inlined_call_operand.hbm [shape: bf16[32,256], index: 1, kind: input, shape index: {}]
  %s2 = inlined_call_operand.vmem [shape: f32[1,256], index: 2, kind: input, shape index: {}]
  %s3 = inlined_call_operand.vmem [shape: s32[16,1], index: 3, kind: output, shape index: {}]
  %s4 = sld [smem:[#allocation0]]
  $region38: #{tpu_custom_call.1} parent=0
    _
  %s6 = ssub.s32 1, %s4
  %s7 = scalar_select 0, %s6, %s4
  $region1: #{tpu_custom_call.1} parent=0
    #allocation4 [shape = 'u8[4096]{0}', space=vmem, size = 0x1000, scoped, tag = 'input window, operand 0, single buffered']
    #allocation5 [shape = 's32[1]{0}', space=sflag, size = 0x4, scoped, tag = 'scoped memory for tpu_custom_call.1']
    #allocation6 [shape = 'u8[16384]{0}', space=vmem, size = 0x4000, scoped, tag = 'input window, operand 1, single buffered']
    #allocation7 [shape = 's32[1]{0}', space=sflag, size = 0x4, scoped, tag = 'scoped memory for tpu_custom_call.1']
    %8 = vsyncpa [#allocation5], 0
    %9 = vsyncpa [#allocation7], 0
    // Predicated region
    $region2: #{tpu_custom_call.1} parent=1 // pred_check
      _
    $region3: #{tpu_custom_call.1} parent=1 // pred_check_branch
      %11 = sbr.rel (0) target = $region5
    $region4: #{tpu_custom_call.1} parent=1 // pred_region
      %s13 = ssub.s32 128, 128
      %14 = vsyncadd [#allocation5], %s13
      %s15 = sshll.u32 [#allocation4], 4
      %s16 = int_to_ptr.vmem [resolvable:$true] %s15
      %21 = dma.hbm_to_vmem [thread:$0]  %s0, 128, %s16, [#allocation5], 64, 64, 4
    $region5: #{tpu_custom_call.1} parent=1 // pred_fallthru
      _
    // Predicated region
    $region6: #{tpu_custom_call.1} parent=1 // pred_check
      _
    $region7: #{tpu_custom_call.1} parent=1 // pred_check_branch
      %23 = sbr.rel (0) target = $region9
    $region8: #{tpu_custom_call.1} parent=1 // pred_region
      %s25 = ssub.s32 512, 512
      %26 = vsyncadd [#allocation7], %s25
      %s27 = sshll.u32 [#allocation6], 4
      %s28 = int_to_ptr.vmem [resolvable:$true] %s27
      %33 = dma.hbm_to_vmem [thread:$0]  %s1, 512, %s28, [#allocation7], 128, 128, 8
    $region9: #{tpu_custom_call.1} parent=1 // pred_fallthru
      _
    // Predicated region
    $region10: #{tpu_custom_call.1} parent=1 // pred_check
      _
    $region11: #{tpu_custom_call.1} parent=1 // pred_check_branch
      %35 = sbr.rel (0) target = $region13
    $region12: #{tpu_custom_call.1} parent=1 // pred_region
      _
    $region13: #{tpu_custom_call.1} parent=1 // pred_fallthru
      _
    // Predicated region
    $region14: #{tpu_custom_call.1} parent=1 // pred_check
      _
    $region15: #{tpu_custom_call.1} parent=1 // pred_check_branch
      %37 = sbr.rel (0) target = $region17
    $region16: #{tpu_custom_call.1} parent=1 // pred_region
      %38 = dma.done [#allocation5], 128
    $region17: #{tpu_custom_call.1} parent=1 // pred_fallthru
      _
    // Predicated region
    $region18: #{tpu_custom_call.1} parent=1 // pred_check
      _
    $region19: #{tpu_custom_call.1} parent=1 // pred_check_branch
      %40 = sbr.rel (0) target = $region21
    $region20: #{tpu_custom_call.1} parent=1 // pred_region
      %41 = dma.done [#allocation7], 512
    $region21: #{tpu_custom_call.1} parent=1 // pred_fallthru
      _
    %p43 = scmp.eq.s32.totalorder 0, 0
    // Predicated region
    $region22: #{tpu_custom_call.1} parent=1 // pred_check
      %p44 = pneg %p43
    $region23: #{tpu_custom_call.1} parent=1 // pred_check_branch
      %46 = sbr.rel (%p44) target = $region25
    $region24: #{tpu_custom_call.1} parent=1 // pred_region
      %vm47 = vcmask 7168
      %48 = vst.msk [vmem:[#allocation2] sm:$0xff] %vm47, -inf
      %49 = vst.msk [vmem:[#allocation2 + $0x8] sm:$0xff] %vm47, -inf
      %50 = vst.msk [vmem:[#allocation3] sm:$0xff] %vm47, 0
      %51 = vst.msk [vmem:[#allocation3 + $0x8] sm:$0xff] %vm47, 0
    $region25: #{tpu_custom_call.1} parent=1 // pred_fallthru
      _
    %v52 = vld [vmem:[#allocation4] sm:$0xf]
    %v53 = vld [vmem:[#allocation4 + $0x4] sm:$0xf]
    %v54 = vld [vmem:[#allocation6] sm:$0xff]
    %v55 = vld [vmem:[#allocation6 + $0x8] sm:$0xff]
    %v56 = vld [vmem:[#allocation6 + $0x10] sm:$0xff]
    %v57 = vld [vmem:[#allocation6 + $0x18] sm:$0xff]
    %v58 = vld [vmem:[%s2] sm:$0x3]
    %v60 = vlaneseq
    %v61 = vshrl.u32 %v60, 7
    %v62 = vsub.s32 0, %v61
    %v63 = vrot.slane %v58, %v62
    %v64 = vlaneseq
    %v65 = vshrl.u32 %v64, 7
    %v66 = vsub.s32 1, %v65
    %v67 = vrot.slane %v58, %v66
    %v72 = vunpack.c.l.b16 %v52
    %v73 = vunpack.c.l.b16 %v53
    %v74 = vpack.c.b16 %v73, %v72
    %v79 = vunpack.c.l.b16 %v54
    %v80 = vunpack.c.h.b16 %v54
    %v81 = vunpack.c.l.b16 %v55
    %v82 = vunpack.c.h.b16 %v55
    %v83 = vunpack.c.l.b16 %v56
    %v84 = vunpack.c.h.b16 %v56
    %v85 = vunpack.c.l.b16 %v57
    %v86 = vunpack.c.h.b16 %v57
    %v87 = vpack.c.b16 %v81, %v79
    %v88 = vpack.c.b16 %v82, %v80
    %v89 = vpack.c.b16 %v85, %v83
    %v90 = vpack.c.b16 %v86, %v84
    %vm95 = vcmask 261120
    %v97 = vsel %vm95, %v74, 0
    %99 = vmatprep.subr.bf16.mxu0 %v88
    %100 = vmatpush1.bf16.msra.mxu0 %v87
    %101 = vmatprep.subr.bf16.mxu0 %v90
    %102 = vmatpush1.bf16.msra.mxu0 %v89
    %103 = vmatprep.subr.bf16.mxu0 0
    %104 = vmatpush1.bf16.msra.mxu0 0
    %105 = vmatprep.subr.bf16.mxu0 0
    %106 = vmatpush1.bf16.msra.mxu0 0
    %107 = vmatprep.subr.bf16.mxu0 0
    %108 = vmatpush1.bf16.msra.mxu0 0
    %109 = vmatprep.subr.bf16.mxu0 0
    %110 = vmatpush1.bf16.msra.mxu0 0
    %111 = vmatprep.subr.bf16.mxu0 0
    %112 = vmatpush1.bf16.msra.mxu0 0
    %113 = vmatprep.subr.bf16.mxu0 0
    %114 = vmatpush1.bf16.msra.mxu0 0
    %115 = vmatprep.subr.bf16.mxu0 0
    %116 = vmatpush1.bf16.msra.mxu0 0
    %117 = vmatprep.subr.bf16.mxu0 0
    %118 = vmatpush1.bf16.msra.mxu0 0
    %119 = vmatprep.subr.bf16.mxu0 0
    %120 = vmatpush1.bf16.msra.mxu0 0
    %121 = vmatprep.subr.bf16.mxu0 0
    %122 = vmatpush1.bf16.msra.mxu0 0
    %123 = vmatprep.subr.bf16.mxu0 0
    %124 = vmatpush1.bf16.msra.mxu0 0
    %125 = vmatprep.subr.bf16.mxu0 0
    %126 = vmatpush1.bf16.msra.mxu0 0
    %127 = vmatprep.subr.bf16.mxu0 0
    %128 = vmatpush1.bf16.msra.mxu0 0
    %129 = vmatprep.subr.bf16.mxu0 0
    %130 = vmatpush1.bf16.msra.mxu0 0
    %131 = vmatprep.mubr.bf16.mxu0 0
    %132 = vmatmul.mubr.bf16.gmra.mrb[0].mxu0 %v97
    %v133 = vpop.f32.mrb[0].mxu0
    %v134 = vadd.f32 %v63, %v133
    %v135 = vpop.f32.mrb[0].mxu0
    %v136 = vadd.f32 %v67, %v135
    %v137 = vpop.f32.mrb[0].mxu0
    %v138 = vadd.f32 %v63, %v137
    %v139 = vpop.f32.mrb[0].mxu0
    %v140 = vadd.f32 %v67, %v139
    %141 = vdwg.mxu0
    %v142 = vlaneseq
    %v143 = vand.u32 %v142, 127
    %v144 = vadd.s32 %v143, 128
    %v145 = vmax.f32 %v134, %v136
    %146 = vmax.xlane.f32.xlu0 %v145
    %v147 = vpop.xlane.xlu0 %146
    %v148 = vmax.f32 %v138, %v140
    %149 = vmax.xlane.f32.xlu0 %v148
    %v150 = vpop.xlane.xlu0 %149
    %vm151 = vcmp.eq.f32.partialorder %v134, %v147
    %vm152 = vcmp.eq.f32.partialorder %v136, %v147
    %vm153 = vcmp.eq.f32.partialorder %v138, %v150
    %vm154 = vcmp.eq.f32.partialorder %v140, %v150
    %v155 = vsel %vm151, %v143, 256
    %v156 = vsel %vm152, %v144, 256
    %v157 = vsel %vm153, %v143, 256
    %v158 = vsel %vm154, %v144, 256
    %vm159 = vcmp.lt.s32.totalorder %v155, %v156
    %v160 = vsel %vm159, %v155, %v156
    %v161 = vand.u32 %v160, 65535
    %v162 = vshra.s32 %v160, 16
    %v163 = vcvt.s32.f32 %v161
    %v164 = vcvt.s32.f32 %v162
    %165 = vmin.xlane.f32.xlu0 %v164
    %v166 = vpop.xlane.xlu0 %165
    %vm167 = vcmp.eq.f32.partialorder %v164, %v166
    %v168 = vsel %vm167, %v163, inf
    %169 = vmin.xlane.f32.xlu0 %v168
    %v170 = vpop.xlane.xlu0 %169
    %v171 = vcvt.f32.s32 %v170
    %v172 = vcvt.f32.s32 %v166
    %v173 = vshll.u32 %v172, 16
    %v174 = vadd.s32 %v173, %v171
    %vm175 = vcmp.lt.s32.totalorder %v157, %v158
    %v176 = vsel %vm175, %v157, %v158
    %v177 = vand.u32 %v176, 65535
    %v178 = vshra.s32 %v176, 16
    %v179 = vcvt.s32.f32 %v177
    %v180 = vcvt.s32.f32 %v178
    %181 = vmin.xlane.f32.xlu0 %v180
    %v182 = vpop.xlane.xlu0 %181
    %vm183 = vcmp.eq.f32.partialorder %v180, %v182
    %v184 = vsel %vm183, %v179, inf
    %185 = vmin.xlane.f32.xlu0 %v184
    %v186 = vpop.xlane.xlu0 %185
    %v187 = vcvt.f32.s32 %v186
    %v188 = vcvt.f32.s32 %v182
    %v189 = vshll.u32 %v188, 16
    %v190 = vadd.s32 %v189, %v187
    %s191 = smul.u32 0, 256
    %v192 = vstv %s191
    %v193 = vadd.s32 %v174, %v192
    %v194 = vadd.s32 %v190, %v192
    %v195 = vld [vmem:[#allocation2] sm:$0xff]
    %v196 = vld [vmem:[#allocation2 + $0x8] sm:$0xff]
    %vm197 = vcmp.gt.f32.partialorder %v147, %v195
    %vm198 = vcmp.gt.f32.partialorder %v150, %v196
    %v199 = vld [vmem:[#allocation3] sm:$0xff]
    %v200 = vld [vmem:[#allocation3 + $0x8] sm:$0xff]
    %v201 = vsel %vm197, %v193, %v199
    %v202 = vsel %vm198, %v194, %v200
    %vm203 = vcmask 7168
    %204 = vst.msk [vmem:[#allocation3] sm:$0xff] %vm203, %v201
    %205 = vst.msk [vmem:[#allocation3 + $0x8] sm:$0xff] %vm203, %v202
    %v206 = vld [vmem:[#allocation2] sm:$0xff]
    %v207 = vld [vmem:[#allocation2 + $0x8] sm:$0xff]
    %v208 = vsel %vm197, %v147, %v206
    %v209 = vsel %vm198, %v150, %v207
    %210 = vst.msk [vmem:[#allocation2] sm:$0xff] %vm203, %v208
    %211 = vst.msk [vmem:[#allocation2 + $0x8] sm:$0xff] %vm203, %v209
    // Predicated region
    $region26: #{tpu_custom_call.1} parent=1 // pred_check
      %p212 = pneg %p43
    $region27: #{tpu_custom_call.1} parent=1 // pred_check_branch
      %214 = sbr.rel (%p212) target = $region29
    $region28: #{tpu_custom_call.1} parent=1 // pred_region
      %v215 = vld [vmem:[#allocation3] sm:$0xff]
      %v216 = vld [vmem:[#allocation3 + $0x8] sm:$0xff]
      %217 = vst.msk [vmem:[%s3] sm:$0xff] %vm203, %v215
      %218 = vst.msk [vmem:[%s3 + $0x8] sm:$0xff] %vm203, %v216
    $region29: #{tpu_custom_call.1} parent=1 // pred_fallthru
      _
    // Predicated region
    $region30: #{tpu_custom_call.1} parent=1 // pred_check
      _
    $region31: #{tpu_custom_call.1} parent=1 // pred_check_branch
      %220 = sbr.rel (0) target = $region33
    $region32: #{tpu_custom_call.1} parent=1 // pred_region
      _
    $region33: #{tpu_custom_call.1} parent=1 // pred_fallthru
      _
    // Predicated region
    $region34: #{tpu_custom_call.1} parent=1 // pred_check
      _
    $region35: #{tpu_custom_call.1} parent=1 // pred_check_branch
      %222 = sbr.rel (0) target = $region37
    $region36: #{tpu_custom_call.1} parent=1 // pred_region
      _
    $region37: #{tpu_custom_call.1} parent=1 // pred_fallthru
      _
    %223 = vsyncpa [#allocation5], 1
    %224 = vsyncpa [#allocation7], 1

// kernel: tpu_custom_call.1
$region0: #{tpu_custom_call.1}
  #allocation0 [shape = 'u32[]', space=smem, size = 0x4, offset = 0x4, fixed_abs, tag = 'smem constant byte address 0x4 - core index']
  #allocation1 [shape = 'u32[144,128]{1,0:T(1,128)}', space=vmem, size = 0x12000, scoped, tag = 'internal scratch']
  #allocation2 [shape = 'f32[16,1]{1,0:T(8,128)}', space=vmem, size = 0x2000, scoped, tag = 'scratch operand']
  #allocation3 [shape = 's32[16,1]{1,0:T(8,128)}', space=vmem, size = 0x2000, scoped, tag = 'scratch operand']
  %s0 = inlined_call_operand.hbm [shape: bf16[16,32], index: 0, kind: input, shape index: {}]
  %s1 = inlined_call_operand.hbm [shape: bf16[32,256], index: 1, kind: input, shape index: {}]
  %s2 = inlined_call_operand.vmem [shape: f32[1,256], index: 2, kind: input, shape index: {}]
  %s3 = inlined_call_operand.vmem [shape: s32[16,1], index: 3, kind: output, shape index: {}]
  %s4 = sld [smem:[#allocation0]]
  $region38: #{tpu_custom_call.1} parent=0
    _
  %s6 = ssub.s32 1, %s4
  %s7 = scalar_select 0, %s6, %s4
  $region1: #{tpu_custom_call.1} parent=0
    #allocation4 [shape = 'u8[4096]{0}', space=vmem, size = 0x1000, scoped, tag = 'input window, operand 0, single buffered']
    #allocation5 [shape = 's32[1]{0}', space=sflag, size = 0x4, scoped, tag = 'scoped memory for tpu_custom_call.1']
    #allocation6 [shape = 'u8[16384]{0}', space=vmem, size = 0x4000, scoped, tag = 'input window, operand 1, single buffered']
    #allocation7 [shape = 's32[1]{0}', space=sflag, size = 0x4, scoped, tag = 'scoped memory for tpu_custom_call.1']
    %8 = vsyncpa [#allocation5], 0
    %9 = vsyncpa [#allocation7], 0
    // Predicated region
    $region2: #{tpu_custom_call.1} parent=1 // pred_check
      _
    $region3: #{tpu_custom_call.1} parent=1 // pred_check_branch
      %11 = sbr.rel (0) target = $region5
    $region4: #{tpu_custom_call.1} parent=1 // pred_region
      %s13 = ssub.s32 128, 128
      %14 = vsyncadd [#allocation5], %s13
      %s15 = sshll.u32 [#allocation4], 4
      %s16 = int_to_ptr.vmem [resolvable:$true] %s15
      %21 = dma.hbm_to_vmem [thread:$0]  %s0, 128, %s16, [#allocation5], 64, 64, 4
    $region5: #{tpu_custom_call.1} parent=1 // pred_fallthru
      _
    // Predicated region
    $region6: #{tpu_custom_call.1} parent=1 // pred_check
      _
    $region7: #{tpu_custom_call.1} parent=1 // pred_check_branch
      %23 = sbr.rel (0) target = $region9
    $region8: #{tpu_custom_call.1} parent=1 // pred_region
      %s25 = ssub.s32 512, 512
      %26 = vsyncadd [#allocation7], %s25
      %s27 = sshll.u32 [#allocation6], 4
      %s28 = int_to_ptr.vmem [resolvable:$true] %s27
      %33 = dma.hbm_to_vmem [thread:$0]  %s1, 512, %s28, [#allocation7], 128, 128, 8
    $region9: #{tpu_custom_call.1} parent=1 // pred_fallthru
      _
    // Predicated region
    $region10: #{tpu_custom_call.1} parent=1 // pred_check
      _
    $region11: #{tpu_custom_call.1} parent=1 // pred_check_branch
      %35 = sbr.rel (0) target = $region13
    $region12: #{tpu_custom_call.1} parent=1 // pred_region
      _
    $region13: #{tpu_custom_call.1} parent=1 // pred_fallthru
      _
    // Predicated region
    $region14: #{tpu_custom_call.1} parent=1 // pred_check
      _
    $region15: #{tpu_custom_call.1} parent=1 // pred_check_branch
      %37 = sbr.rel (0) target = $region17
    $region16: #{tpu_custom_call.1} parent=1 // pred_region
      %38 = dma.done [#allocation5], 128
    $region17: #{tpu_custom_call.1} parent=1 // pred_fallthru
      _
    // Predicated region
    $region18: #{tpu_custom_call.1} parent=1 // pred_check
      _
    $region19: #{tpu_custom_call.1} parent=1 // pred_check_branch
      %40 = sbr.rel (0) target = $region21
    $region20: #{tpu_custom_call.1} parent=1 // pred_region
      %41 = dma.done [#allocation7], 512
    $region21: #{tpu_custom_call.1} parent=1 // pred_fallthru
      _
    %p43 = scmp.eq.s32.totalorder 0, 0
    // Predicated region
    $region22: #{tpu_custom_call.1} parent=1 // pred_check
      %p44 = pneg %p43
    $region23: #{tpu_custom_call.1} parent=1 // pred_check_branch
      %46 = sbr.rel (%p44) target = $region25
    $region24: #{tpu_custom_call.1} parent=1 // pred_region
      %vm47 = vcmask 7168
      %48 = vst.msk [vmem:[#allocation2] sm:$0xff] %vm47, -inf
      %49 = vst.msk [vmem:[#allocation2 + $0x8] sm:$0xff] %vm47, -inf
      %50 = vst.msk [vmem:[#allocation3] sm:$0xff] %vm47, 0
      %51 = vst.msk [vmem:[#allocation3 + $0x8] sm:$0xff] %vm47, 0
    $region25: #{tpu_custom_call.1} parent=1 // pred_fallthru
      _
    %v52 = vld [vmem:[#allocation4] sm:$0xf]
    %v53 = vld [vmem:[#allocation4 + $0x4] sm:$0xf]
    %v54 = vld [vmem:[#allocation6] sm:$0xff]
    %v55 = vld [vmem:[#allocation6 + $0x8] sm:$0xff]
    %v56 = vld [vmem:[#allocation6 + $0x10] sm:$0xff]
    %v57 = vld [vmem:[#allocation6 + $0x18] sm:$0xff]
    %v58 = vld [vmem:[%s2] sm:$0x3]
    %v60 = vlaneseq
    %v61 = vshrl.u32 %v60, 7
    %v62 = vsub.s32 0, %v61
    %v63 = vrot.slane %v58, %v62
    %v64 = vlaneseq
    %v65 = vshrl.u32 %v64, 7
    %v66 = vsub.s32 1, %v65
    %v67 = vrot.slane %v58, %v66
    %v72 = vunpack.c.l.b16 %v52
    %v73 = vunpack.c.l.b16 %v53
    %v74 = vpack.c.b16 %v73, %v72
    %v79 = vunpack.c.l.b16 %v54
    %v80 = vunpack.c.h.b16 %v54
    %v81 = vunpack.c.l.b16 %v55
    %v82 = vunpack.c.h.b16 %v55
    %v83 = vunpack.c.l.b16 %v56
    %v84 = vunpack.c.h.b16 %v56
    %v85 = vunpack.c.l.b16 %v57
    %v86 = vunpack.c.h.b16 %v57
    %v87 = vpack.c.b16 %v81, %v79
    %v88 = vpack.c.b16 %v82, %v80
    %v89 = vpack.c.b16 %v85, %v83
    %v90 = vpack.c.b16 %v86, %v84
    %vm95 = vcmask 261120
    %v97 = vsel %vm95, %v74, 0
    %99 = vmatprep.subr.bf16.mxu0 %v88
    %100 = vmatpush1.bf16.msra.mxu0 %v87
    %101 = vmatprep.subr.bf16.mxu0 %v90
    %102 = vmatpush1.bf16.msra.mxu0 %v89
    %103 = vmatprep.subr.bf16.mxu0 0
    %104 = vmatpush1.bf16.msra.mxu0 0
    %105 = vmatprep.subr.bf16.mxu0 0
    %106 = vmatpush1.bf16.msra.mxu0 0
    %107 = vmatprep.subr.bf16.mxu0 0
    %108 = vmatpush1.bf16.msra.mxu0 0
    %109 = vmatprep.subr.bf16.mxu0 0
    %110 = vmatpush1.bf16.msra.mxu0 0
    %111 = vmatprep.subr.bf16.mxu0 0
    %112 = vmatpush1.bf16.msra.mxu0 0
    %113 = vmatprep.subr.bf16.mxu0 0
    %114 = vmatpush1.bf16.msra.mxu0 0
    %115 = vmatprep.subr.bf16.mxu0 0
    %116 = vmatpush1.bf16.msra.mxu0 0
    %117 = vmatprep.subr.bf16.mxu0 0
    %118 = vmatpush1.bf16.msra.mxu0 0
    %119 = vmatprep.subr.bf16.mxu0 0
    %120 = vmatpush1.bf16.msra.mxu0 0
    %121 = vmatprep.subr.bf16.mxu0 0
    %122 = vmatpush1.bf16.msra.mxu0 0
    %123 = vmatprep.subr.bf16.mxu0 0
    %124 = vmatpush1.bf16.msra.mxu0 0
    %125 = vmatprep.subr.bf16.mxu0 0
    %126 = vmatpush1.bf16.msra.mxu0 0
    %127 = vmatprep.subr.bf16.mxu0 0
    %128 = vmatpush1.bf16.msra.mxu0 0
    %129 = vmatprep.subr.bf16.mxu0 0
    %130 = vmatpush1.bf16.msra.mxu0 0
    %131 = vmatprep.mubr.bf16.mxu0 0
    %132 = vmatmul.mubr.bf16.gmra.mrb[0].mxu0 %v97
    %v133 = vpop.f32.mrb[0].mxu0
    %v134 = vadd.f32 %v63, %v133
    %v135 = vpop.f32.mrb[0].mxu0
    %v136 = vadd.f32 %v67, %v135
    %v137 = vpop.f32.mrb[0].mxu0
    %v138 = vadd.f32 %v63, %v137
    %v139 = vpop.f32.mrb[0].mxu0
    %v140 = vadd.f32 %v67, %v139
    %141 = vdwg.mxu0
    %v142 = vlaneseq
    %v143 = vand.u32 %v142, 127
    %v144 = vadd.s32 %v143, 128
    %v145 = vmax.f32 %v134, %v136
    %146 = vmax.xlane.f32.xlu0 %v145
    %v147 = vpop.xlane.xlu0 %146
    %v148 = vmax.f32 %v138, %v140
    %149 = vmax.xlane.f32.xlu0 %v148
    %v150 = vpop.xlane.xlu0 %149
    %vm151 = vcmp.eq.f32.partialorder %v134, %v147
    %vm152 = vcmp.eq.f32.partialorder %v136, %v147
    %vm153 = vcmp.eq.f32.partialorder %v138, %v150
    %vm154 = vcmp.eq.f32.partialorder %v140, %v150
    %v155 = vsel %vm151, %v143, 256
    %v156 = vsel %vm152, %v144, 256
    %v157 = vsel %vm153, %v143, 256
    %v158 = vsel %vm154, %v144, 256
    %vm159 = vcmp.lt.s32.totalorder %v155, %v156
    %v160 = vsel %vm159, %v155, %v156
    %v161 = vand.u32 %v160, 65535
    %v162 = vshra.s32 %v160, 16
    %v163 = vcvt.s32.f32 %v161
    %v164 = vcvt.s32.f32 %v162
    %165 = vmin.xlane.f32.xlu0 %v164
    %v166 = vpop.xlane.xlu0 %165
    %vm167 = vcmp.eq.f32.partialorder %v164, %v166
    %v168 = vsel %vm167, %v163, inf
    %169 = vmin.xlane.f32.xlu0 %v168
    %v170 = vpop.xlane.xlu0 %169
    %v171 = vcvt.f32.s32 %v170
    %v172 = vcvt.f32.s32 %v166
    %v173 = vshll.u32 %v172, 16
    %v174 = vadd.s32 %v173, %v171
    %vm175 = vcmp.lt.s32.totalorder %v157, %v158
    %v176 = vsel %vm175, %v157, %v158
    %v177 = vand.u32 %v176, 65535
    %v178 = vshra.s32 %v176, 16
    %v179 = vcvt.s32.f32 %v177
    %v180 = vcvt.s32.f32 %v178
    %181 = vmin.xlane.f32.xlu0 %v180
    %v182 = vpop.xlane.xlu0 %181
    %vm183 = vcmp.eq.f32.partialorder %v180, %v182
    %v184 = vsel %vm183, %v179, inf
    %185 = vmin.xlane.f32.xlu0 %v184
    %v186 = vpop.xlane.xlu0 %185
    %v187 = vcvt.f32.s32 %v186
    %v188 = vcvt.f32.s32 %v182
    %v189 = vshll.u32 %v188, 16
    %v190 = vadd.s32 %v189, %v187
    %s191 = smul.u32 0, 256
    %v192 = vstv %s191
    %v193 = vadd.s32 %v174, %v192
    %v194 = vadd.s32 %v190, %v192
    %v195 = vld [vmem:[#allocation2] sm:$0xff]
    %v196 = vld [vmem:[#allocation2 + $0x8] sm:$0xff]
    %vm197 = vcmp.gt.f32.partialorder %v147, %v195
    %vm198 = vcmp.gt.f32.partialorder %v150, %v196
    %v199 = vld [vmem:[#allocation3] sm:$0xff]
    %v200 = vld [vmem:[#allocation3 + $0x8] sm:$0xff]
    %v201 = vsel %vm197, %v193, %v199
    %v202 = vsel %vm198, %v194, %v200
    %vm203 = vcmask 7168
    %204 = vst.msk [vmem:[#allocation3] sm:$0xff] %vm203, %v201
    %205 = vst.msk [vmem:[#allocation3 + $0x8] sm:$0xff] %vm203, %v202
    %v206 = vld [vmem:[#allocation2] sm:$0xff]
    %v207 = vld [vmem:[#allocation2 + $0x8] sm:$0xff]
    %v208 = vsel %vm197, %v147, %v206
    %v209 = vsel %vm198, %v150, %v207
    %210 = vst.msk [vmem:[#allocation2] sm:$0xff] %vm203, %v208
    %211 = vst.msk [vmem:[#allocation2 + $0x8] sm:$0xff] %vm203, %v209
    // Predicated region
    $region26: #{tpu_custom_call.1} parent=1 // pred_check
      %p212 = pneg %p43
    $region27: #{tpu_custom_call.1} parent=1 // pred_check_branch
      %214 = sbr.rel (%p212) target = $region29
    $region28: #{tpu_custom_call.1} parent=1 // pred_region
      %v215 = vld [vmem:[#allocation3] sm:$0xff]
      %v216 = vld [vmem:[#allocation3 + $0x8] sm:$0xff]
      %217 = vst.msk [vmem:[%s3] sm:$0xff] %vm203, %v215
      %218 = vst.msk [vmem:[%s3 + $0x8] sm:$0xff] %vm203, %v216
    $region29: #{tpu_custom_call.1} parent=1 // pred_fallthru
      _
    // Predicated region
    $region30: #{tpu_custom_call.1} parent=1 // pred_check
      _
    $region31: #{tpu_custom_call.1} parent=1 // pred_check_branch
      %220 = sbr.rel (0) target = $region33
    $region32: #{tpu_custom_call.1} parent=1 // pred_region
      _
    $region33: #{tpu_custom_call.1} parent=1 // pred_fallthru
      _
    // Predicated region
    $region34: #{tpu_custom_call.1} parent=1 // pred_check
      _
    $region35: #{tpu_custom_call.1} parent=1 // pred_check_branch
      %222 = sbr.rel (0) target = $region37
    $region36: #{tpu_custom_call.1} parent=1 // pred_region
      _
    $region37: #{tpu_custom_call.1} parent=1 // pred_fallthru
      _
    %223 = vsyncpa [#allocation5], 1
    %224 = vsyncpa [#allocation7], 1

</llo_original>
